<compile_context>
chip_gen: v5e
topology: v5e:2x2
jax: 0.10.0
libtpu: 0.0.40
codegen_flags: <defaults>
</compile_context>

<pallas_src>
import functools
import math

import jax
import jax.numpy as jnp
from jax import lax
from jax.experimental import pallas as pl
from jax.experimental.pallas import tpu as pltpu

# Sized for v7x's 64 MiB per-TensorCore VMEM (leave headroom for
# double-buffering / system allocations); also valid for v5e/v6e (128 MiB).
_VMEM_LIMIT = 48 * 1024 * 1024

# Weight panels up to this many bytes are kept fully resident in VMEM
# (full-(K, N) block, constant index_map -> DMA'd from HBM exactly once per
# pallas_call).  Covers every BERT-base matrix (largest: 768x3072 bf16=4.5MiB).
_WEIGHT_RESIDENT_BYTES = 8 * 1024 * 1024


def _pick_tile(dim, target, aligns=(256, 128, 16, 8)):
    """Largest tile <= target that divides dim, preferring larger alignments."""
    if dim <= target:
        return dim
    for align in aligns:
        t = (target // align) * align
        while t >= align:
            if dim % t == 0:
                return t
            t -= align
    return dim


def _gelu_tanh(x):
    # TODO(synk): reference BERT uses exact erf-GELU; tanh approximation used
    # here so the activation can be fused into the matmul epilogue.
    c = math.sqrt(2.0 / math.pi)
    return 0.5 * x * (1.0 + jnp.tanh(c * (x + 0.044715 * x * x * x)))


# ----------------------------- Pallas kernels -----------------------------
# -- weight-resident (full-K, full-N) GEMM: bias + activation fused ---------


def _matmul_bias_resident_kernel(x_ref, w_ref, b_ref, o_ref, *, activation):
    y = jnp.dot(x_ref[...], w_ref[...], preferred_element_type=jnp.float32)
    y = y + b_ref[...]
    if activation == "tanh":
        y = jnp.tanh(y)
    elif activation == "gelu":
        y = _gelu_tanh(y)
    o_ref[...] = y.astype(o_ref.dtype)


# -- K-tiled fallback (only used if the weight panel would not fit VMEM) ----


def _matmul_bias_kernel(x_ref, w_ref, b_ref, o_ref, acc_ref, *, activation):
    @pl.when(pl.program_id(2) == 0)
    def _():
        acc_ref[...] = jnp.zeros_like(acc_ref)

    acc_ref[...] += jnp.dot(x_ref[...], w_ref[...],
                            preferred_element_type=jnp.float32)

    @pl.when(pl.program_id(2) == pl.num_programs(2) - 1)
    def _():
        y = acc_ref[...] + b_ref[...]
        if activation == "tanh":
            y = jnp.tanh(y)
        elif activation == "gelu":
            y = _gelu_tanh(y)
        o_ref[...] = y.astype(o_ref.dtype)


def matmul_bias(x, w, b, activation="none", out_dtype=jnp.bfloat16):
    """x: (M, K) bf16, w: (K, N) bf16, b: (N,) -> (M, N)."""
    M, K = x.shape
    N = w.shape[1]
    b2 = b.reshape(1, N).astype(jnp.float32)

    if K * N * 2 <= _WEIGHT_RESIDENT_BYTES:
        tm = _pick_tile(M, 512, (256, 16, 8))
        return pl.pallas_call(
            functools.partial(_matmul_bias_resident_kernel,
                              activation=activation),
            out_shape=jax.ShapeDtypeStruct((M, N), out_dtype),
            grid=(M // tm,),
            in_specs=[
                pl.BlockSpec((tm, K), lambda i: (i, 0)),
                pl.BlockSpec((K, N), lambda i: (0, 0)),   # weight resident
                pl.BlockSpec((1, N), lambda i: (0, 0)),
            ],
            out_specs=pl.BlockSpec((tm, N), lambda i: (i, 0)),
            compiler_params=pltpu.CompilerParams(
                dimension_semantics=("parallel",),
                vmem_limit_bytes=_VMEM_LIMIT),
        )(x, w, b2)

    # fallback: 3-D tiled with f32 accumulator, 256-aligned MXU-facing tiles
    tm = _pick_tile(M, 512, (256, 16, 8))
    tn = _pick_tile(N, 512, (256, 128))
    tk = _pick_tile(K, 512, (256, 128))
    grid = (M // tm, N // tn, K // tk)
    return pl.pallas_call(
        functools.partial(_matmul_bias_kernel, activation=activation),
        out_shape=jax.ShapeDtypeStruct((M, N), out_dtype),
        grid=grid,
        in_specs=[
            pl.BlockSpec((tm, tk), lambda i, j, k: (i, k)),
            pl.BlockSpec((tk, tn), lambda i, j, k: (k, j)),
            pl.BlockSpec((1, tn), lambda i, j, k: (0, j)),
        ],
        out_specs=pl.BlockSpec((tm, tn), lambda i, j, k: (i, j)),
        scratch_shapes=[pltpu.VMEM((tm, tn), jnp.float32)],
        compiler_params=pltpu.CompilerParams(
            dimension_semantics=("parallel", "parallel", "arbitrary"),
            vmem_limit_bytes=_VMEM_LIMIT),
    )(x, w, b2)


# -- GEMM + bias + residual + LayerNorm epilogue -----------------------------


def _matmul_ln_resident_kernel(x_ref, w_ref, b_ref, r_ref, g_ref, be_ref,
                               o_ref, *, eps):
    y = jnp.dot(x_ref[...], w_ref[...], preferred_element_type=jnp.float32)
    y = y + b_ref[...] + r_ref[...].astype(jnp.float32)
    mean = jnp.mean(y, axis=-1, keepdims=True)
    var = jnp.mean((y - mean) ** 2, axis=-1, keepdims=True)
    yn = (y - mean) * lax.rsqrt(var + eps)
    o_ref[...] = (yn * g_ref[...] + be_ref[...]).astype(o_ref.dtype)


def _matmul_ln_kernel(x_ref, w_ref, b_ref, r_ref, g_ref, be_ref, o_ref,
                      acc_ref, *, eps):
    @pl.when(pl.program_id(1) == 0)
    def _():
        acc_ref[...] = jnp.zeros_like(acc_ref)

    acc_ref[...] += jnp.dot(x_ref[...], w_ref[...],
                            preferred_element_type=jnp.float32)

    @pl.when(pl.program_id(1) == pl.num_programs(1) - 1)
    def _():
        y = acc_ref[...] + b_ref[...] + r_ref[...].astype(jnp.float32)
        mean = jnp.mean(y, axis=-1, keepdims=True)
        var = jnp.mean((y - mean) ** 2, axis=-1, keepdims=True)
        yn = (y - mean) * lax.rsqrt(var + eps)
        o_ref[...] = (yn * g_ref[...] + be_ref[...]).astype(o_ref.dtype)


def matmul_bias_res_ln(x, w, b, residual, gamma, beta, eps=1e-12):
    """LayerNorm(x @ w + b + residual); N is one lane-dense tile."""
    M, K = x.shape
    N = w.shape[1]
    args = (x, w, b.reshape(1, N).astype(jnp.float32), residual,
            gamma.reshape(1, N).astype(jnp.float32),
            beta.reshape(1, N).astype(jnp.float32))

    if K * N * 2 <= _WEIGHT_RESIDENT_BYTES:
        tm = _pick_tile(M, 512, (256, 16, 8))
        return pl.pallas_call(
            functools.partial(_matmul_ln_resident_kernel, eps=eps),
            out_shape=jax.ShapeDtypeStruct((M, N), jnp.bfloat16),
            grid=(M // tm,),
            in_specs=[
                pl.BlockSpec((tm, K), lambda i: (i, 0)),
                pl.BlockSpec((K, N), lambda i: (0, 0)),   # weight resident
                pl.BlockSpec((1, N), lambda i: (0, 0)),
                pl.BlockSpec((tm, N), lambda i: (i, 0)),  # residual stream
                pl.BlockSpec((1, N), lambda i: (0, 0)),
                pl.BlockSpec((1, N), lambda i: (0, 0)),
            ],
            out_specs=pl.BlockSpec((tm, N), lambda i: (i, 0)),
            compiler_params=pltpu.CompilerParams(
                dimension_semantics=("parallel",),
                vmem_limit_bytes=_VMEM_LIMIT),
        )(*args)

    # fallback: K-tiled with accumulator
    tm = _pick_tile(M, 512, (256, 16, 8))
    tk = _pick_tile(K, 512, (256, 128))
    grid = (M // tm, K // tk)
    return pl.pallas_call(
        functools.partial(_matmul_ln_kernel, eps=eps),
        out_shape=jax.ShapeDtypeStruct((M, N), jnp.bfloat16),
        grid=grid,
        in_specs=[
            pl.BlockSpec((tm, tk), lambda i, k: (i, k)),
            pl.BlockSpec((tk, N), lambda i, k: (k, 0)),
            pl.BlockSpec((1, N), lambda i, k: (0, 0)),
            pl.BlockSpec((tm, N), lambda i, k: (i, 0)),
            pl.BlockSpec((1, N), lambda i, k: (0, 0)),
            pl.BlockSpec((1, N), lambda i, k: (0, 0)),
        ],
        out_specs=pl.BlockSpec((tm, N), lambda i, k: (i, 0)),
        scratch_shapes=[pltpu.VMEM((tm, N), jnp.float32)],
        compiler_params=pltpu.CompilerParams(
            dimension_semantics=("parallel", "arbitrary"),
            vmem_limit_bytes=_VMEM_LIMIT),
    )(*args)


# -- embedding add + LayerNorm (no f32 (M,H) HBM intermediate) --------------


def _emb_ln_kernel(w_ref, pt_ref, g_ref, b_ref, o_ref, *, eps):
    x = w_ref[...].astype(jnp.float32) + pt_ref[...]
    mean = jnp.mean(x, axis=-1, keepdims=True)
    var = jnp.mean((x - mean) ** 2, axis=-1, keepdims=True)
    y = (x - mean) * lax.rsqrt(var + eps)
    o_ref[...] = (y * g_ref[...] + b_ref[...]).astype(o_ref.dtype)


def emb_layernorm(word, pos_type, gamma, beta, *, B, L, eps=1e-12):
    """word: (B*L, H) bf16 gathered word embeddings; pos_type: (L, H) f32."""
    M, H = word.shape
    return pl.pallas_call(
        functools.partial(_emb_ln_kernel, eps=eps),
        out_shape=jax.ShapeDtypeStruct((M, H), jnp.bfloat16),
        grid=(B,),
        in_specs=[
            pl.BlockSpec((L, H), lambda b: (b, 0)),
            pl.BlockSpec((L, H), lambda b: (0, 0)),   # pos+type resident
            pl.BlockSpec((1, H), lambda b: (0, 0)),
            pl.BlockSpec((1, H), lambda b: (0, 0)),
        ],
        out_specs=pl.BlockSpec((L, H), lambda b: (b, 0)),
        compiler_params=pltpu.CompilerParams(
            dimension_semantics=("parallel",),
            vmem_limit_bytes=_VMEM_LIMIT),
    )(word, pos_type, gamma.reshape(1, H).astype(jnp.float32),
      beta.reshape(1, H).astype(jnp.float32))


# -- multi-head self-attention ----------------------------------------------


def _attn_kernel(q_ref, k_ref, v_ref, m_ref, o_ref, ctx_ref, *, n_heads,
                 scale):
    """One (q-block, batch) tile; per-head contexts written into f32 scratch,
    single lane-dense (tq, H) store at the end."""
    mask = m_ref[0].astype(jnp.float32)        # (1, L) additive mask
    H = q_ref.shape[1]
    d = H // n_heads

    for hh in range(n_heads):
        lo, hi = hh * d, (hh + 1) * d
        qh = q_ref[:, lo:hi]                   # (tq, d) bf16
        kh = k_ref[:, lo:hi]                   # (L,  d) bf16
        vh = v_ref[:, lo:hi]                   # (L,  d) bf16
        s = pl.dot(qh, kh, trans_b=True) * scale + mask   # (tq, L) f32
        s = s - jnp.max(s, axis=-1, keepdims=True)
        p = jnp.exp(s)
        p = p * pl.reciprocal(jnp.sum(p, axis=-1, keepdims=True), approx=True)
        ctx_ref[:, lo:hi] = jnp.dot(p.astype(vh.dtype), vh,
                                    preferred_element_type=jnp.float32)
    o_ref[...] = ctx_ref[...].astype(o_ref.dtype)


def fused_attention(qkv, mask_add, *, B, L, H, n_heads):
    """qkv: (B*L, 3H) slab [q|k|v]; mask_add: (B, 1, L) additive -> (B*L, H)."""
    M = B * L
    d = H // n_heads
    scale = 1.0 / math.sqrt(d)
    tq = _pick_tile(L, 256, (256, 128, 16, 8))
    n_q = L // tq
    # TODO(synk): for very long sequences (L >= 2K) replace the resident
    # (L, H) K/V blocks with a flash-style inner KV loop + online softmax.
    return pl.pallas_call(
        functools.partial(_attn_kernel, n_heads=n_heads, scale=scale),
        out_shape=jax.ShapeDtypeStruct((M, H), jnp.bfloat16),
        grid=(B, n_q),
        in_specs=[
            pl.BlockSpec((tq, H), lambda b, qi: (b * n_q + qi, 0)),  # q block
            pl.BlockSpec((L, H), lambda b, qi: (b, 1)),   # k slice, revisited
            pl.BlockSpec((L, H), lambda b, qi: (b, 2)),   # v slice, revisited
            pl.BlockSpec((1, 1, L), lambda b, qi: (b, 0, 0)),  # mask
        ],
        out_specs=pl.BlockSpec((tq, H), lambda b, qi: (b * n_q + qi, 0)),
        scratch_shapes=[pltpu.VMEM((tq, H), jnp.float32)],
        compiler_params=pltpu.CompilerParams(
            dimension_semantics=("parallel", "parallel"),
            vmem_limit_bytes=_VMEM_LIMIT),
    )(qkv, qkv, qkv, mask_add)


# --------------------------- BERT forward (glue) ---------------------------


def init_params(key, *, vocab, max_pos, type_vocab, hidden, n_layers, n_heads,
                intermediate):
    keys = iter(jax.random.split(key, 4 + n_layers * 4))
    std = 0.02

    def w(shape):
        return (jax.random.normal(next(keys), shape, jnp.float32) * std
                ).astype(jnp.bfloat16)

    params = dict(
        word_emb=jax.random.normal(next(keys), (vocab, hidden), jnp.float32) * std,
        pos_emb=jax.random.normal(next(keys), (max_pos, hidden), jnp.float32) * std,
        type_emb=jax.random.normal(next(keys), (type_vocab, hidden), jnp.float32) * std,
        emb_ln_g=jnp.ones((hidden,), jnp.float32),
        emb_ln_b=jnp.zeros((hidden,), jnp.float32),
        pool_w=w((hidden, hidden)),
        pool_b=jnp.zeros((hidden,), jnp.float32),
        layers=[],
    )
    for _ in range(n_layers):
        params["layers"].append(dict(
            w_qkv=w((hidden, 3 * hidden)),                  # fused Q|K|V
            b_qkv=jnp.zeros((3 * hidden,), jnp.float32),
            wo=w((hidden, hidden)), bo=jnp.zeros((hidden,), jnp.float32),
            ln1_g=jnp.ones((hidden,), jnp.float32),
            ln1_b=jnp.zeros((hidden,), jnp.float32),
            w1=w((hidden, intermediate)),
            b1=jnp.zeros((intermediate,), jnp.float32),
            w2=w((intermediate, hidden)),
            b2=jnp.zeros((hidden,), jnp.float32),
            ln2_g=jnp.ones((hidden,), jnp.float32),
            ln2_b=jnp.zeros((hidden,), jnp.float32),
        ))
    return params


def bert_encoder_forward(params, token, att_mask, *, n_heads):
    """Equivalent of BERTEncoder.forward: returns pooled CLS rep (B, H)."""
    B, L = token.shape
    H = params["word_emb"].shape[1]
    M = B * L

    # embeddings: gathers in JAX (glue), add + LayerNorm fused in Pallas
    word = jnp.take(params["word_emb"], token.reshape(-1), axis=0
                    ).astype(jnp.bfloat16)                       # (M, H)
    pos_type = (params["pos_emb"][:L]
                + params["type_emb"][0][None, :]).astype(jnp.float32)  # (L, H)
    h = emb_layernorm(word, pos_type, params["emb_ln_g"],
                      params["emb_ln_b"], B=B, L=L)              # (M, H) bf16

    # additive attention mask: (1 - mask) * -10000, shape (B, 1, L)
    mask_add = ((1.0 - att_mask.astype(jnp.float32)) * -10000.0
                ).reshape(B, 1, L)

    for lyr in params["layers"]:
        # self-attention: fused QKV projection, heads sliced via BlockSpec
        qkv = matmul_bias(h, lyr["w_qkv"], lyr["b_qkv"])        # (M, 3H)
        ctx = fused_attention(qkv, mask_add, B=B, L=L, H=H, n_heads=n_heads)
        # output projection + residual + LayerNorm fused in one kernel
        h = matmul_bias_res_ln(ctx, lyr["wo"], lyr["bo"], h,
                               lyr["ln1_g"], lyr["ln1_b"])

        # feed-forward: GELU fused into W1 epilogue, residual+LN into W2
        ffn = matmul_bias(h, lyr["w1"], lyr["b1"], activation="gelu")
        h = matmul_bias_res_ln(ffn, lyr["w2"], lyr["b2"], h,
                               lyr["ln2_g"], lyr["ln2_b"])

    # pooler: dense + tanh on the CLS token
    cls = h.reshape(B, L, H)[:, 0, :]                           # (B, H)
    pooled = matmul_bias(cls, params["pool_w"], params["pool_b"],
                         activation="tanh", out_dtype=jnp.float32)
    return pooled


# TODO(synk): tokenize() (host-side WordPiece tokenization) and loading a
# pretrained checkpoint have no Pallas equivalent; weights are synthetic.


if __name__ == "__main__":
    # small, BERT-shaped config (L=16 keeps bf16 (16,128) sublane packing happy)
    B, L = 2, 16
    VOCAB, MAX_POS, TYPE_VOCAB = 64, 32, 2
    HIDDEN, N_LAYERS, N_HEADS, INTERMEDIATE = 128, 2, 4, 256

    key = jax.random.PRNGKey(0)
    k_params, k_tok = jax.random.split(key)

    params = init_params(k_params, vocab=VOCAB, max_pos=MAX_POS,
                         type_vocab=TYPE_VOCAB, hidden=HIDDEN,
                         n_layers=N_LAYERS, n_heads=N_HEADS,
                         intermediate=INTERMEDIATE)

    token = jax.random.randint(k_tok, (B, L), 0, VOCAB, dtype=jnp.int32)
    lens = jnp.array([L, 10], dtype=jnp.int32)
    att_mask = (jnp.arange(L)[None, :] < lens[:, None]).astype(jnp.int32)

    pooled = bert_encoder_forward(params, token, att_mask, n_heads=N_HEADS)
    pooled = jax.block_until_ready(pooled)

    assert pooled.shape == (B, HIDDEN)
    assert bool(jnp.all(jnp.isfinite(pooled)))
    print("KERNEL_OK")
</pallas_src>

<mosaic_0001>
module attributes {stable_mosaic.version = 11 : i64} {
  func.func @_emb_ln_kernel(%arg0: i32, %arg1: memref<16x128xbf16, #tpu.memory_space<vmem>>, %arg2: memref<16x128xf32, #tpu.memory_space<vmem>>, %arg3: memref<1x128xf32, #tpu.memory_space<vmem>>, %arg4: memref<1x128xf32, #tpu.memory_space<vmem>>, %arg5: memref<16x128xbf16, #tpu.memory_space<vmem>>) attributes {dimension_semantics = [#tpu.dimension_semantics<parallel>], iteration_bounds = array<i64: 2>, scalar_prefetch = 0 : i64, scratch_operands = 0 : i64, tpu.core_type = #tpu.core_type<tc>, window_params = [{transform_indices = @transform_0, window_bounds = array<i64: 16, 128>}, {pipeline_mode = #tpu.pipeline_mode<synchronous>, transform_indices = @transform_1, window_bounds = array<i64: 16, 128>}, {pipeline_mode = #tpu.pipeline_mode<synchronous>, transform_indices = @transform_2, window_bounds = array<i64: 1, 128>}, {pipeline_mode = #tpu.pipeline_mode<synchronous>, transform_indices = @transform_3, window_bounds = array<i64: 1, 128>}, {transform_indices = @transform_4, window_bounds = array<i64: 16, 128>}]} {
    %c0 = arith.constant 0 : index
    %c0_0 = arith.constant 0 : index
    %0 = vector.load %arg1[%c0, %c0_0] : memref<16x128xbf16, #tpu.memory_space<vmem>>, vector<16x128xbf16>
    %1 = arith.extf %0 : vector<16x128xbf16> to vector<16x128xf32>
    %c0_1 = arith.constant 0 : index
    %c0_2 = arith.constant 0 : index
    %2 = vector.load %arg2[%c0_1, %c0_2] : memref<16x128xf32, #tpu.memory_space<vmem>>, vector<16x128xf32>
    %3 = arith.addf %1, %2 : vector<16x128xf32>
    %cst = arith.constant dense<0.000000e+00> : vector<16xf32>
    %4 = vector.multi_reduction <add>, %3, %cst [1] : vector<16x128xf32> to vector<16xf32>
    %5 = vector.shape_cast %4 : vector<16xf32> to vector<16x1xf32>
    %cst_3 = arith.constant 1.280000e+02 : f32
    %6 = vector.broadcast %cst_3 : f32 to vector<16x1xf32>
    %7 = arith.divf %5, %6 : vector<16x1xf32>
    %8 = vector.broadcast %7 : vector<16x1xf32> to vector<16x128xf32>
    %9 = arith.subf %3, %8 : vector<16x128xf32>
    %10 = arith.mulf %9, %9 : vector<16x128xf32>
    %cst_4 = arith.constant dense<0.000000e+00> : vector<16xf32>
    %11 = vector.multi_reduction <add>, %10, %cst_4 [1] : vector<16x128xf32> to vector<16xf32>
    %12 = vector.shape_cast %11 : vector<16xf32> to vector<16x1xf32>
    %cst_5 = arith.constant 1.280000e+02 : f32
    %13 = vector.broadcast %cst_5 : f32 to vector<16x1xf32>
    %14 = arith.divf %12, %13 : vector<16x1xf32>
    %15 = vector.broadcast %7 : vector<16x1xf32> to vector<16x128xf32>
    %16 = arith.subf %3, %15 : vector<16x128xf32>
    %cst_6 = arith.constant 9.99999996E-13 : f32
    %17 = vector.broadcast %cst_6 : f32 to vector<16x1xf32>
    %18 = arith.addf %14, %17 : vector<16x1xf32>
    %19 = math.rsqrt %18 : vector<16x1xf32>
    %20 = vector.broadcast %19 : vector<16x1xf32> to vector<16x128xf32>
    %21 = arith.mulf %16, %20 : vector<16x128xf32>
    %c0_7 = arith.constant 0 : index
    %c0_8 = arith.constant 0 : index
    %22 = vector.load %arg3[%c0_7, %c0_8] : memref<1x128xf32, #tpu.memory_space<vmem>>, vector<1x128xf32>
    %23 = vector.broadcast %22 : vector<1x128xf32> to vector<16x128xf32>
    %24 = arith.mulf %21, %23 : vector<16x128xf32>
    %c0_9 = arith.constant 0 : index
    %c0_10 = arith.constant 0 : index
    %25 = vector.load %arg4[%c0_9, %c0_10] : memref<1x128xf32, #tpu.memory_space<vmem>>, vector<1x128xf32>
    %26 = vector.broadcast %25 : vector<1x128xf32> to vector<16x128xf32>
    %27 = arith.addf %24, %26 : vector<16x128xf32>
    %28 = arith.truncf %27 : vector<16x128xf32> to vector<16x128xbf16>
    %c0_11 = arith.constant 0 : index
    %c0_12 = arith.constant 0 : index
    %29 = vector.load %arg5[%c0_11, %c0_12] : memref<16x128xbf16, #tpu.memory_space<vmem>>, vector<16x128xbf16>
    tpu.vector_store %arg5[%c0_11, %c0_12], %28 {strides = array<i32>} : memref<16x128xbf16, #tpu.memory_space<vmem>>, vector<16x128xbf16>,
    return
  }
  func.func @transform_0(%arg0: i32) -> (i32, i32) {
    %c0_i32 = arith.constant 0 : i32
    %c0_i32_0 = arith.constant 0 : i32
    return %arg0, %c0_i32 : i32, i32
  }
  func.func @transform_1(%arg0: i32) -> (i32, i32) {
    %c0_i32 = arith.constant 0 : i32
    %c0_i32_0 = arith.constant 0 : i32
    %c0_i32_1 = arith.constant 0 : i32
    return %c0_i32, %c0_i32_0 : i32, i32
  }
  func.func @transform_2(%arg0: i32) -> (i32, i32) {
    %c0_i32 = arith.constant 0 : i32
    %c0_i32_0 = arith.constant 0 : i32
    %c0_i32_1 = arith.constant 0 : i32
    return %c0_i32, %c0_i32_0 : i32, i32
  }
  func.func @transform_3(%arg0: i32) -> (i32, i32) {
    %c0_i32 = arith.constant 0 : i32
    %c0_i32_0 = arith.constant 0 : i32
    %c0_i32_1 = arith.constant 0 : i32
    return %c0_i32, %c0_i32_0 : i32, i32
  }
  func.func @transform_4(%arg0: i32) -> (i32, i32) {
    %c0_i32 = arith.constant 0 : i32
    %c0_i32_0 = arith.constant 0 : i32
    return %arg0, %c0_i32 : i32, i32
  }
}

</mosaic_0001>

<llo_original>
// kernel: tpu_custom_call.1
$region0: #{tpu_custom_call.1}
  #allocation0 [shape = 'u32[]', space=smem, size = 0x4, offset = 0x4, fixed_abs, tag = 'smem constant byte address 0x4 - core index']
  #allocation1 [shape = 'u32[72,128]{1,0:T(1,128)}', space=vmem, size = 0x9000, scoped, tag = 'internal scratch']
  %s0 = inlined_call_operand.hbm [shape: bf16[32,128], index: 0, kind: input, shape index: {}]
  %s1 = inlined_call_operand.hbm [shape: f32[16,128], index: 1, kind: input, shape index: {}]
  %s2 = inlined_call_operand.vmem [shape: f32[1,128], index: 2, kind: input, shape index: {}]
  %s3 = inlined_call_operand.vmem [shape: f32[1,128], index: 3, kind: input, shape index: {}]
  %s4 = inlined_call_operand.hbm [shape: bf16[32,128], index: 4, kind: output, shape index: {}]
  %s5 = sld [smem:[#allocation0]]
  $region57: #{tpu_custom_call.1} parent=0
    _
  %s7 = ssub.s32 1, %s5
  %s8 = scalar_select 0, %s7, %s5
  $region1: #{tpu_custom_call.1} parent=0
    #allocation2 [shape = 'u8[8192]{0}', space=vmem, size = 0x2000, scoped, tag = 'input window, operand 0']
    #allocation3 [shape = 's32[2]{0}', space=sflag, size = 0x8, scoped, tag = 'scoped memory for tpu_custom_call.1']
    #allocation4 [shape = 's32[2]{0}', space=sflag, size = 0x8, scoped, tag = 'scoped memory for tpu_custom_call.1']
    #allocation5 [shape = 'u8[8192]{0}', space=vmem, size = 0x2000, scoped, tag = 'input window, operand 1, single buffered']
    #allocation6 [shape = 's32[1]{0}', space=sflag, size = 0x4, scoped, tag = 'scoped memory for tpu_custom_call.1']
    #allocation7 [shape = 'u8[8192]{0}', space=vmem, size = 0x2000, scoped, tag = 'output window, operand 0']
    %9 = vsyncpa [#allocation3], 0
    %s10 = scalar_lea.sflag [#allocation3], 1
    %11 = vsyncpa %s10, 0
    %12 = vsyncpa [#allocation6], 0
    %13 = vsyncpa [#allocation4], 0
    %s14 = scalar_lea.sflag [#allocation4], 1
    %15 = vsyncpa %s14, 0
    loop: start=0, step=1, limit=4
    $region2: #{tpu_custom_call.1} parent=1 // loop_pre_header
      _
    $region3: #{tpu_custom_call.1} parent=1 // loop_header
      %s17 = sphi 0, %s21
      %p18 = scmp.ge.s32.totalorder %s17, 4
      %s27 = sphi 0, %s29
      %s30 = sphi 0, %s27
      %s31 = sphi 0, %s30
      %s47 = sphi 0, %s31
      %s51 = sphi 0, %s51
      %s53 = sphi 0, %s51
      %s54 = sphi 0, %s53
      %s68 = sphi 0, %s54
      %s72 = sphi 0, %s72
      %s74 = sphi 0, %s72
      %s75 = sphi 0, %s74
      %s89 = sphi 0, %s75
      %s93 = sphi 0, %s93
      %s95 = sphi 0, %s93
      %s96 = sphi 0, %s95
      %s110 = sphi 0, %s96
      %s116 = sphi 0, %s118
      %s119 = sphi 0, %s116
      %s120 = sphi 0, %s119
      %s136 = sphi 0, %s120
    $region4: #{tpu_custom_call.1} parent=1 // loop_header_branch
      %20 = sbr.rel (%p18) target = $region8
    $region5: #{tpu_custom_call.1} parent=1 // loop_body
      %s22 = ssub.s32 %s17, 1
      %s23 = ssub.s32 %s17, 2
      %s24 = sadd.s32 %s17, 1
      %s25 = ssub.s32 %s17, %s24
      %p26 = scmp.eq.s32.totalorder %s25, 0
      %s28 = sadd.s32 %s27, 1
      %s29 = scalar_select %p26, %s27, %s28
      %p32 = pneg %p26
      %p33 = scmp.eq.s32.totalorder %s17, 1
      %p34 = por %p32, %p33
      %p35 = scmp.ne.s32.totalorder %s27, %s30
      %p36 = scmp.eq.s32.totalorder %s17, 0
      %p37 = por %p35, %p36
      %p38 = scmp.ne.s32.totalorder %s27, %s30
      %p39 = scmp.eq.s32.totalorder %s22, 1
      %p40 = por %p38, %p39
      %p41 = scmp.ne.s32.totalorder %s30, %s31
      %p42 = scmp.eq.s32.totalorder %s22, 0
      %p43 = por %p41, %p42
      %p44 = scmp.ne.s32.totalorder %s30, %s31
      %p45 = scmp.eq.s32.totalorder %s23, 1
      %p46 = por %p44, %p45
      %p48 = scmp.ne.s32.totalorder %s31, %s47
      %p49 = scmp.eq.s32.totalorder %s23, 0
      %p50 = por %p48, %p49
      %s52 = sadd.s32 %s51, 1
      %p55 = scmp.eq.s32.totalorder %s17, 1
      %p56 = scmp.ne.s32.totalorder %s51, %s53
      %p57 = scmp.eq.s32.totalorder %s17, 0
      %p58 = por %p56, %p57
      %p59 = scmp.ne.s32.totalorder %s51, %s53
      %p60 = scmp.eq.s32.totalorder %s22, 1
      %p61 = por %p59, %p60
      %p62 = scmp.ne.s32.totalorder %s53, %s54
      %p63 = scmp.eq.s32.totalorder %s22, 0
      %p64 = por %p62, %p63
      %p65 = scmp.ne.s32.totalorder %s53, %s54
      %p66 = scmp.eq.s32.totalorder %s23, 1
      %p67 = por %p65, %p66
      %p69 = scmp.ne.s32.totalorder %s54, %s68
      %p70 = scmp.eq.s32.totalorder %s23, 0
      %p71 = por %p69, %p70
      %s73 = sadd.s32 %s72, 1
      %p76 = scmp.eq.s32.totalorder %s17, 1
      %p77 = scmp.ne.s32.totalorder %s72, %s74
      %p78 = scmp.eq.s32.totalorder %s17, 0
      %p79 = por %p77, %p78
      %p80 = scmp.ne.s32.totalorder %s72, %s74
      %p81 = scmp.eq.s32.totalorder %s22, 1
      %p82 = por %p80, %p81
      %p83 = scmp.ne.s32.totalorder %s74, %s75
      %p84 = scmp.eq.s32.totalorder %s22, 0
      %p85 = por %p83, %p84
      %p86 = scmp.ne.s32.totalorder %s74, %s75
      %p87 = scmp.eq.s32.totalorder %s23, 1
      %p88 = por %p86, %p87
      %p90 = scmp.ne.s32.totalorder %s75, %s89
      %p91 = scmp.eq.s32.totalorder %s23, 0
      %p92 = por %p90, %p91
      %s94 = sadd.s32 %s93, 1
      %p97 = scmp.eq.s32.totalorder %s17, 1
      %p98 = scmp.ne.s32.totalorder %s93, %s95
      %p99 = scmp.eq.s32.totalorder %s17, 0
      %p100 = por %p98, %p99
      %p101 = scmp.ne.s32.totalorder %s93, %s95
      %p102 = scmp.eq.s32.totalorder %s22, 1
      %p103 = por %p101, %p102
      %p104 = scmp.ne.s32.totalorder %s95, %s96
      %p105 = scmp.eq.s32.totalorder %s22, 0
      %p106 = por %p104, %p105
      %p107 = scmp.ne.s32.totalorder %s95, %s96
      %p108 = scmp.eq.s32.totalorder %s23, 1
      %p109 = por %p107, %p108
      %p111 = scmp.ne.s32.totalorder %s96, %s110
      %p112 = scmp.eq.s32.totalorder %s23, 0
      %p113 = por %p111, %p112
      %s114 = ssub.s32 %s17, %s24
      %p115 = scmp.eq.s32.totalorder %s114, 0
      %s117 = sadd.s32 %s116, 1
      %s118 = scalar_select %p115, %s116, %s117
      %p121 = pneg %p115
      %p122 = scmp.eq.s32.totalorder %s17, 1
      %p123 = por %p121, %p122
      %p124 = scmp.ne.s32.totalorder %s116, %s119
      %p125 = scmp.eq.s32.totalorder %s17, 0
      %p126 = por %p124, %p125
      %p127 = scmp.ne.s32.totalorder %s116, %s119
      %p128 = scmp.eq.s32.totalorder %s22, 1
      %p129 = por %p127, %p128
      %p130 = scmp.ne.s32.totalorder %s119, %s120
      %p131 = scmp.eq.s32.totalorder %s22, 0
      %p132 = por %p130, %p131
      %p133 = scmp.ne.s32.totalorder %s119, %s120
      %p134 = scmp.eq.s32.totalorder %s23, 1
      %p135 = por %p133, %p134
      %p137 = scmp.ne.s32.totalorder %s120, %s136
      %p138 = scmp.eq.s32.totalorder %s23, 0
      %p139 = por %p137, %p138
      %p140 = scmp.le.s32.totalorder 1, %s17
      %p141 = scmp.lt.s32.totalorder %s17, 3
      %p142 = pnand %p140, %p141
      %p143 = pneg %p142
      // Predicated region
      $region9: #{tpu_custom_call.1} parent=5 // pred_check
        _
      $region10: #{tpu_custom_call.1} parent=5 // pred_check_branch
        %145 = sbr.rel (%p142) target = $region12
      $region11: #{tpu_custom_call.1} parent=5 // pred_region
        %s146 = ssub.s32 %s17, 1
        // Predicated region
        $region13: #{tpu_custom_call.1} parent=11 // pred_check
          %p147 = pneg %p64
        $region14: #{tpu_custom_call.1} parent=11 // pred_check_branch
          %149 = sbr.rel (%p147) target = $region16
        $region15: #{tpu_custom_call.1} parent=11 // pred_region
          %151 = vsyncadd [#allocation6], 0
          %s152 = sshll.u32 %s1, 4
          %s153 = int_to_ptr.hbm [resolvable:$true] %s152
          %s154 = sshll.u32 [#allocation5], 4
          %s155 = int_to_ptr.vmem [resolvable:$true] %s154
          %160 = dma.hbm_to_vmem [thread:$0]  %s153, 256, %s155, [#allocation6], 128, 128, 8
        $region16: #{tpu_custom_call.1} parent=11 // pred_fallthru
          _
        // Predicated region
        $region17: #{tpu_custom_call.1} parent=11 // pred_check
          %p161 = pneg %p85
        $region18: #{tpu_custom_call.1} parent=11 // pred_check_branch
          %163 = sbr.rel (%p161) target = $region20
        $region19: #{tpu_custom_call.1} parent=11 // pred_region
          _
        $region20: #{tpu_custom_call.1} parent=11 // pred_fallthru
          _
        // Predicated region
        $region21: #{tpu_custom_call.1} parent=11 // pred_check
          %p164 = pneg %p106
        $region22: #{tpu_custom_call.1} parent=11 // pred_check_branch
          %166 = sbr.rel (%p164) target = $region24
        $region23: #{tpu_custom_call.1} parent=11 // pred_region
          _
        $region24: #{tpu_custom_call.1} parent=11 // pred_fallthru
          _
      $region12: #{tpu_custom_call.1} parent=5 // pred_fallthru
        _
      %p167 = scmp.lt.s32.totalorder %s17, 2
      // Predicated region
      $region25: #{tpu_custom_call.1} parent=5 // pred_check
        %p168 = pneg %p167
      $region26: #{tpu_custom_call.1} parent=5 // pred_check_branch
        %170 = sbr.rel (%p168) target = $region28
      $region27: #{tpu_custom_call.1} parent=5 // pred_region
        // Predicated region
        $region29: #{tpu_custom_call.1} parent=27 // pred_check
          %p171 = pneg %p37
        $region30: #{tpu_custom_call.1} parent=27 // pred_check_branch
          %173 = sbr.rel (%p171) target = $region32
        $region31: #{tpu_custom_call.1} parent=27 // pred_region
          %s174 = sand.u32 %s27, 1
          %s175 = scalar_lea.sflag [#allocation3], %s174
          %s176 = sand.u32 %s27, 1
          %s177 = smul.addr %s176, 8
          %s178 = scalar_lea.vmem [#allocation2], %s177
          %s179 = smul.u32 2, %s17
          %181 = vsyncadd %s175, 0
          %s182 = smul.addr %s179, 4
          %s183 = scalar_lea.hbm %s0, %s182
          %s184 = sshll.u32 %s183, 4
          %s185 = int_to_ptr.hbm [resolvable:$true] %s184
          %s186 = sshll.u32 %s178, 4
          %s187 = int_to_ptr.vmem [resolvable:$true] %s186
          %192 = dma.hbm_to_vmem [thread:$0]  %s185, 128, %s187, %s175, 64, 64, 4
        $region32: #{tpu_custom_call.1} parent=27 // pred_fallthru
          _
      $region28: #{tpu_custom_call.1} parent=5 // pred_fallthru
        _
      %p193 = scmp.le.s32.totalorder 1, %s17
      %p194 = scmp.lt.s32.totalorder %s17, 3
      %p195 = pnand %p193, %p194
      %p196 = pneg %p195
      // Predicated region
      $region33: #{tpu_custom_call.1} parent=5 // pred_check
        _
      $region34: #{tpu_custom_call.1} parent=5 // pred_check_branch
        %198 = sbr.rel (%p195) target = $region36
      $region35: #{tpu_custom_call.1} parent=5 // pred_region
        %s199 = ssub.s32 %s17, 1
        %s200 = sand.u32 %s30, 1
        %s201 = scalar_lea.sflag [#allocation3], %s200
        %s202 = sand.u32 %s30, 1
        %s203 = smul.addr %s202, 8
        %s204 = scalar_lea.vmem [#allocation2], %s203
        // Predicated region
        $region37: #{tpu_custom_call.1} parent=35 // pred_check
          %p205 = pneg %p43
        $region38: #{tpu_custom_call.1} parent=35 // pred_check_branch
          %207 = sbr.rel (%p205) target = $region40
        $region39: #{tpu_custom_call.1} parent=35 // pred_region
          %209 = dma.done %s201, 128
        $region40: #{tpu_custom_call.1} parent=35 // pred_fallthru
          _
        // Predicated region
        $region41: #{tpu_custom_call.1} parent=35 // pred_check
          %p210 = pneg %p64
        $region42: #{tpu_custom_call.1} parent=35 // pred_check_branch
          %212 = sbr.rel (%p210) target = $region44
        $region43: #{tpu_custom_call.1} parent=35 // pred_region
          %214 = dma.done [#allocation6], 256
        $region44: #{tpu_custom_call.1} parent=35 // pred_fallthru
          _
        %s215 = sand.u32 %s30, 1
        %s216 = scalar_lea.sflag [#allocation3], %s215
        %s217 = sand.u32 %s30, 1
        %s218 = smul.addr %s217, 8
        %s219 = scalar_lea.vmem [#allocation2], %s218
        %p220 = pneg %p43
        %p221 = pneg %p40
        %p222 = pneg %p64
        %p223 = pneg %p61
        %p224 = pneg %p85
        %p225 = pneg %p82
        %p226 = pneg %p106
        %p227 = pneg %p103
        %p228 = pneg %p132
        %p229 = pneg %p129
        %s230 = sand.u32 %s119, 1
        %s231 = scalar_lea.sflag [#allocation4], %s230
        %s232 = sand.u32 %s119, 1
        %s233 = smul.addr %s232, 8
        %s234 = scalar_lea.vmem [#allocation7], %s233
        %s235 = smul.u32 2, %s22
        %s236 = smul.u32 2, %s22
        %v237 = vld [vmem:[%s204] sm:$0xf]
        %v238 = vld [vmem:[%s204 + $0x4] sm:$0xf]
        %v239 = vunpack.c.l.bf16 %v237
        %v240 = vunpack.c.l.bf16 %v238
        %v241 = vld [vmem:[#allocation5] sm:$0xff]
        %v242 = vld [vmem:[#allocation5 + $0x8] sm:$0xff]
        %v243 = vadd.f32 %v239, %v241
        %v244 = vadd.f32 %v240, %v242
        %245 = vadd.xlane.f32.xlu0 %v243
        %v246 = vpop.xlane.xlu0 %245
        %247 = vadd.xlane.f32.xlu0 %v244
        %v248 = vpop.xlane.xlu0 %247
        %v249 = vrcp.pop 128.0
        %v250 = vmul.f32 128.0, %v249
        %v251 = vsub.f32 1.0, %v250
        %v252 = vmul.f32 %v249, %v251
        %v253 = vadd.f32 %v249, %v252
        %vm254 = vweird.f32 %v249
        %v255 = vsel %vm254, %v249, %v253
        %v256 = vmul.f32 %v246, %v255
        %v257 = vmul.f32 %v248, %v255
        %v258 = vsub.f32 %v243, %v256
        %v259 = vsub.f32 %v244, %v257
        %v260 = vmul.f32 %v258, %v258
        %v261 = vmul.f32 %v259, %v259
        %262 = vadd.xlane.f32.xlu0 %v260
        %v263 = vpop.xlane.xlu0 %262
        %264 = vadd.xlane.f32.xlu0 %v261
        %v265 = vpop.xlane.xlu0 %264
        %v266 = vmul.f32 %v263, %v255
        %v267 = vmul.f32 %v265, %v255
        %v268 = vadd.f32 %v266, 1e-12
        %v269 = vadd.f32 %v267, 1e-12
        %v270 = vrsqrt.pop %v268
        %v271 = vmul.f32 %v270, %v268
        %v272 = vmul.f32 %v271, %v270
        %v273 = vmul.f32 0.5, %v272
        %v274 = vsub.f32 1.5, %v273
        %v275 = vmul.f32 %v270, %v274
        %vm276 = vweird.f32 %v268
        %vm277 = vweird.f32 %v270
        %vm278 = vmor %vm276, %vm277
        %v279 = vsel %vm278, %v270, %v275
        %v280 = vrsqrt.pop %v269
        %v281 = vmul.f32 %v280, %v269
        %v282 = vmul.f32 %v281, %v280
        %v283 = vmul.f32 0.5, %v282
        %v284 = vsub.f32 1.5, %v283
        %v285 = vmul.f32 %v280, %v284
        %vm286 = vweird.f32 %v269
        %vm287 = vweird.f32 %v280
        %vm288 = vmor %vm286, %vm287
        %v289 = vsel %vm288, %v280, %v285
        %v290 = vmul.f32 %v258, %v279
        %v291 = vmul.f32 %v259, %v289
        %v292 = vld [vmem:[%s2] sm:$0x1]
        %v294 = vperm.slane %v292, 0
        %v296 = vmul.f32 %v290, %v294
        %v297 = vmul.f32 %v291, %v294
        %v298 = vld [vmem:[%s3] sm:$0x1]
        %v300 = vperm.slane %v298, 0
        %v302 = vadd.f32 %v296, %v300
        %v303 = vadd.f32 %v297, %v300
        %v304 = vpack.c.bf16 %v302, %v302
        %v305 = vpack.c.bf16 %v303, %v303
        %306 = vst [vmem:[%s234] sm:$0xf] %v304
        %307 = vst [vmem:[%s234 + $0x4] sm:$0xf] %v305
        %s308 = sand.u32 %s119, 1
        %s309 = scalar_lea.sflag [#allocation4], %s308
        %s310 = sand.u32 %s119, 1
        %s311 = smul.addr %s310, 8
        %s312 = scalar_lea.vmem [#allocation7], %s311
        // Predicated region
        $region45: #{tpu_custom_call.1} parent=35 // pred_check
          %p313 = pneg %p129
        $region46: #{tpu_custom_call.1} parent=35 // pred_check_branch
          %315 = sbr.rel (%p313) target = $region48
        $region47: #{tpu_custom_call.1} parent=35 // pred_region
          %s316 = smul.u32 2, %s22
          %318 = vsyncadd %s309, 0
          %s319 = smul.addr %s316, 4
          %s320 = scalar_lea.hbm %s4, %s319
          %s321 = sshll.u32 %s312, 4
          %s322 = int_to_ptr.vmem [resolvable:$true] %s321
          %s323 = sshll.u32 %s320, 4
          %s324 = int_to_ptr.hbm [resolvable:$true] %s323
          %329 = dma.vmem_to_hbm [thread:$0]  %s322, 128, %s324, %s309, 64, 64, 4
        $region48: #{tpu_custom_call.1} parent=35 // pred_fallthru
          _
      $region36: #{tpu_custom_call.1} parent=5 // pred_fallthru
        _
      %p330 = scmp.le.s32.totalorder 2, %s17
      // Predicated region
      $region49: #{tpu_custom_call.1} parent=5 // pred_check
        %p331 = pneg %p330
      $region50: #{tpu_custom_call.1} parent=5 // pred_check_branch
        %333 = sbr.rel (%p331) target = $region52
      $region51: #{tpu_custom_call.1} parent=5 // pred_region
        %s334 = ssub.s32 %s17, 2
        // Predicated region
        $region53: #{tpu_custom_call.1} parent=51 // pred_check
          %p335 = pneg %p135
        $region54: #{tpu_custom_call.1} parent=51 // pred_check_branch
          %337 = sbr.rel (%p335) target = $region56
        $region55: #{tpu_custom_call.1} parent=51 // pred_region
          %s338 = sand.u32 %s120, 1
          %s339 = scalar_lea.sflag [#allocation4], %s338
          %s340 = sand.u32 %s120, 1
          %s341 = smul.addr %s340, 8
          %s342 = scalar_lea.vmem [#allocation7], %s341
          %344 = dma.done %s339, 128
        $region56: #{tpu_custom_call.1} parent=51 // pred_fallthru
          _
      $region52: #{tpu_custom_call.1} parent=5 // pred_fallthru
        _
    $region6: #{tpu_custom_call.1} parent=1 // loop_footer
      %s21 = sadd.s32 1, %s17
    $region7: #{tpu_custom_call.1} parent=1 // loop_footer_branch
      %16 = sbr.rel target = $region3
    $region8: #{tpu_custom_call.1} parent=1 // loop_exit
      _
    %345 = vsyncpa [#allocation3], 1
    %s346 = scalar_lea.sflag [#allocation3], 1
    %347 = vsyncpa %s346, 1
    %348 = vsyncpa [#allocation6], 1
    %349 = vsyncpa [#allocation4], 1
    %s350 = scalar_lea.sflag [#allocation4], 1
    %351 = vsyncpa %s350, 1

</llo_original>
